<compile_context>
chip_gen: v5e
topology: v5e:2x2
jax: 0.10.0
libtpu: 0.0.40
codegen_flags: <defaults>
</compile_context>

<pallas_src>
import functools

import jax
import jax.numpy as jnp
from jax import lax
from jax.experimental import pallas as pl
from jax.experimental.pallas import tpu as pltpu


# ----------------------------------------------------------------------------
# Hardware-aware budgets / tile selection
# ----------------------------------------------------------------------------

@functools.lru_cache(maxsize=None)
def _hw_config():
    """VMEM budget and tile caps gated on the physical VMEM capacity."""
    vmem_cap = 128 * 1024 * 1024
    try:
        info = pltpu.get_tpu_info()
        vmem_cap = int(getattr(info, "vmem_capacity_bytes", vmem_cap))
    except Exception:
        pass
    if vmem_cap <= 64 * 1024 * 1024:
        # v7x-class: 64 MiB per TensorCore -> keep the scoped budget modest.
        return {"vmem_limit": 44 * 1024 * 1024,
                "lin_m": 512, "lin_n": 1024, "lin_k": 512,
                "attn_q": 512, "attn_kv": 512}
    # v5e / v6e: 128 MiB -> bigger tiles cut KV re-reads and per-step overhead.
    return {"vmem_limit": 96 * 1024 * 1024,
            "lin_m": 1024, "lin_n": 2048, "lin_k": 1024,
            "attn_q": 1024, "attn_kv": 1024}


def _pick_tile(dim, cap, align):
    """Largest legal block size for `dim`: the full extent if it fits under
    `cap`, otherwise the largest multiple of `align` <= cap dividing `dim`,
    otherwise the full extent (always a legal BlockSpec block)."""
    if dim <= cap:
        return dim
    t = (cap // align) * align
    while t >= align:
        if dim % t == 0:
            return t
        t -= align
    # TODO(synk): pad + mask ragged dims instead of one full-extent block.
    return dim


# ----------------------------------------------------------------------------
# Tiled linear (matmul + bias) kernel
# ----------------------------------------------------------------------------

def _linear_kernel(x_ref, w_ref, b_ref, o_ref, acc_ref):
    # One (tm, tn) output tile; K is the innermost ("arbitrary") grid axis.
    @pl.when(pl.program_id(2) == 0)
    def _init():
        acc_ref[...] = jnp.zeros_like(acc_ref)

    acc_ref[...] += jnp.dot(x_ref[...], w_ref[...],
                            preferred_element_type=jnp.float32)

    @pl.when(pl.program_id(2) == pl.num_programs(2) - 1)
    def _finalize():
        o_ref[...] = (acc_ref[...] + b_ref[...].astype(jnp.float32)
                      ).astype(o_ref.dtype)


def pallas_linear(x2d, w_t, bias):
    """x2d: (M, K), w_t: (K, N) (pre-transposed torch weight), bias: (N,)."""
    M, K = x2d.shape
    N = w_t.shape[1]
    cfg = _hw_config()
    tm = _pick_tile(M, cfg["lin_m"], 8)      # sublane dim: multiple of 8
    tn = _pick_tile(N, cfg["lin_n"], 128)    # lane dim:    multiple of 128
    tk = _pick_tile(K, cfg["lin_k"], 128)    # lane dim of x block
    itemsize = x2d.dtype.itemsize
    cost = pl.CostEstimate(
        flops=int(2 * M * N * K),
        transcendentals=0,
        bytes_accessed=int(itemsize * (M * K + K * N + M * N + N)))
    return pl.pallas_call(
        _linear_kernel,
        out_shape=jax.ShapeDtypeStruct((M, N), x2d.dtype),
        grid_spec=pltpu.PrefetchScalarGridSpec(
            num_scalar_prefetch=0,
            grid=(M // tm, N // tn, K // tk),
            in_specs=[
                pl.BlockSpec((tm, tk), lambda i, j, k: (i, k)),
                pl.BlockSpec((tk, tn), lambda i, j, k: (k, j)),
                pl.BlockSpec((1, tn), lambda i, j, k: (0, j)),
            ],
            out_specs=pl.BlockSpec((tm, tn), lambda i, j, k: (i, j)),
            scratch_shapes=[pltpu.VMEM((tm, tn), jnp.float32)],
        ),
        compiler_params=pltpu.CompilerParams(
            dimension_semantics=("parallel", "parallel", "arbitrary"),
            vmem_limit_bytes=cfg["vmem_limit"]),
        cost_estimate=cost,
    )(x2d, w_t, bias.reshape(1, N))


# ----------------------------------------------------------------------------
# Flash-style cross-attention kernel (lane-dense (B, H, S, D) layout,
# RoPE + scale fused and hoisted out of the kv loop)
# ----------------------------------------------------------------------------

def _flash_attn_kernel(q_ref, k_ref, v_ref, cos_ref, sin_ref, o_ref,
                       qrot_sc, m_sc, l_sc, acc_sc, *, head_dim):
    D = head_dim
    kv_i = pl.program_id(3)

    @pl.when(kv_i == 0)
    def _init():
        # RoPE (+ softmax scale) on q is kv-invariant: compute once per
        # (b, h, q-block).  Half-split layout -> rotate_half == roll by D//2.
        qf = q_ref[0, 0].astype(jnp.float32)                         # (tq, D)
        q_rot = qf * cos_ref[...] + pltpu.roll(qf, D // 2, axis=1) * sin_ref[...]
        qrot_sc[...] = q_rot.astype(qrot_sc.dtype)                   # model dtype
        m_sc[...] = jnp.full_like(m_sc, -jnp.inf)
        l_sc[...] = jnp.zeros_like(l_sc)
        acc_sc[...] = jnp.zeros_like(acc_sc)

    k = k_ref[0, 0]                                                  # (tkv, D)
    v = v_ref[0, 0]                                                  # (tkv, D)

    # Q @ K^T without materializing a K transpose; bf16-in / f32-acc when the
    # model runs bf16 (operands stay in the input dtype).
    s = lax.dot_general(qrot_sc[...], k,
                        dimension_numbers=(((1,), (1,)), ((), ())),
                        preferred_element_type=jnp.float32)          # (tq, tkv)

    m_prev = m_sc[...]                                               # (tq, 1)
    m_new = jnp.maximum(m_prev, jnp.max(s, axis=-1, keepdims=True))
    alpha = jnp.exp(m_prev - m_new)
    p = jnp.exp(s - m_new)
    l_sc[...] = alpha * l_sc[...] + jnp.sum(p, axis=-1, keepdims=True)
    acc_sc[...] = alpha * acc_sc[...] + jnp.dot(
        p.astype(v.dtype), v, preferred_element_type=jnp.float32)
    m_sc[...] = m_new

    @pl.when(kv_i == pl.num_programs(3) - 1)
    def _finalize():
        inv_l = pl.reciprocal(l_sc[...], approx=False)
        o_ref[0, 0] = (acc_sc[...] * inv_l).astype(o_ref.dtype)


def pallas_flash_cross_attention(q, k, v, cos_hs, sin_hs):
    """q: (B, H, S1, D); k, v: (B, H, S2, D); cos_hs/sin_hs: (S1, D) half-split
    RoPE tables with the softmax scale folded in.  Returns (B, H, S1, D)."""
    B, H, S1, D = q.shape
    S2 = k.shape[2]
    cfg = _hw_config()
    tq = _pick_tile(S1, cfg["attn_q"], 8)
    tkv = _pick_tile(S2, cfg["attn_kv"], 8)
    # Keep >= 2 parallel grid steps so both v7x TensorCores get work.
    if B * H * (S1 // tq) < 2 and tq % 16 == 0:
        tq //= 2
    grid = (B, H, S1 // tq, S2 // tkv)

    kernel = functools.partial(_flash_attn_kernel, head_dim=D)
    itemsize = q.dtype.itemsize
    cost = pl.CostEstimate(
        flops=int(4 * B * H * S1 * S2 * D),
        transcendentals=int(B * H * S1 * S2),
        bytes_accessed=int(itemsize * (q.size + k.size + v.size + B * H * S1 * D)
                           + 4 * (cos_hs.size + sin_hs.size)))
    return pl.pallas_call(
        kernel,
        out_shape=jax.ShapeDtypeStruct((B, H, S1, D), q.dtype),
        grid_spec=pltpu.PrefetchScalarGridSpec(
            num_scalar_prefetch=0,
            grid=grid,
            in_specs=[
                pl.BlockSpec((1, 1, tq, D), lambda b, h, i, kk: (b, h, i, 0)),
                pl.BlockSpec((1, 1, tkv, D), lambda b, h, i, kk: (b, h, kk, 0)),
                pl.BlockSpec((1, 1, tkv, D), lambda b, h, i, kk: (b, h, kk, 0)),
                pl.BlockSpec((tq, D), lambda b, h, i, kk: (i, 0)),
                pl.BlockSpec((tq, D), lambda b, h, i, kk: (i, 0)),
            ],
            out_specs=pl.BlockSpec((1, 1, tq, D), lambda b, h, i, kk: (b, h, i, 0)),
            scratch_shapes=[
                pltpu.VMEM((tq, D), q.dtype),       # RoPE'd q (model dtype)
                pltpu.VMEM((tq, 1), jnp.float32),   # running max
                pltpu.VMEM((tq, 1), jnp.float32),   # running sum
                pltpu.VMEM((tq, D), jnp.float32),   # accumulator
            ],
        ),
        compiler_params=pltpu.CompilerParams(
            dimension_semantics=("parallel", "parallel", "parallel", "arbitrary"),
            vmem_limit_bytes=cfg["vmem_limit"]),
        cost_estimate=cost,
    )(q, k, v, cos_hs, sin_hs)


# ----------------------------------------------------------------------------
# One-time parameter / RoPE-table preparation (out of the forward path)
# ----------------------------------------------------------------------------

def _half_split_perm(head_dim):
    # interleaved (re, im, re, im, ...) -> half-split ([re...],[im...])
    return jnp.concatenate([jnp.arange(0, head_dim, 2),
                            jnp.arange(1, head_dim, 2)])


def prepare_cross_attention_params(params, num_heads):
    """Permute Q/K output features to half-split-per-head layout (so in-kernel
    rotate_half == roll by D//2), pre-transpose all weights.  Call once."""
    qdim = params["q_w"].shape[0]
    head_dim = qdim // num_heads
    perm_head = _half_split_perm(head_dim)
    full_perm = (jnp.arange(num_heads)[:, None] * head_dim
                 + perm_head[None, :]).reshape(-1)                   # (qdim,)
    q_w = params["q_w"][full_perm]
    q_b = params["q_b"][full_perm]
    kv_w = jnp.concatenate([params["kv_w"][full_perm],
                            params["kv_w"][qdim:]], axis=0)
    kv_b = jnp.concatenate([params["kv_b"][full_perm],
                            params["kv_b"][qdim:]], axis=0)
    return {
        "q_wt": jnp.asarray(q_w.T), "q_b": q_b,
        "kv_wt": jnp.asarray(kv_w.T), "kv_b": kv_b,
        "out_wt": jnp.asarray(params["out_w"].T), "out_b": params["out_b"],
        "num_heads": num_heads, "head_dim": head_dim,
    }


def prepare_rope_tables(freqs_cis_img, head_dim, s1):
    """Half-split RoPE tables with rotate_half sign and the softmax scale
    folded in, so the kernel only does q*cos + roll(q, D//2)*sin."""
    scale = head_dim ** (-0.5)
    if freqs_cis_img is None:
        return (jnp.full((s1, head_dim), scale, jnp.float32),
                jnp.zeros((s1, head_dim), jnp.float32))
    cos, sin = freqs_cis_img                                   # (s1, head_dim)
    perm_head = _half_split_perm(head_dim)
    sign = jnp.concatenate([-jnp.ones((head_dim // 2,), jnp.float32),
                            jnp.ones((head_dim // 2,), jnp.float32)])
    cos_hs = cos[:, perm_head].astype(jnp.float32) * scale
    sin_hs = sin[:, perm_head].astype(jnp.float32) * sign * scale
    return cos_hs, sin_hs


# ----------------------------------------------------------------------------
# CrossAttention forward
# ----------------------------------------------------------------------------

def cross_attention_forward(prep, x, y, rope_tables):
    """x: (b, s1, qdim), y: (b, s2, kdim) -> (out,) with out: (b, s1, qdim).
    Matches CrossAttention.forward with qk_norm=False, attn_drop=proj_drop=0."""
    b, s1, qdim = x.shape
    _, s2, kdim = y.shape
    H, D = prep["num_heads"], prep["head_dim"]
    cos_hs, sin_hs = rope_tables

    # Projections (tiled, pipelined matmul kernels).  q_norm / k_norm are
    # Identity (qk_norm=False).
    q2d = pallas_linear(x.reshape(b * s1, qdim), prep["q_wt"], prep["q_b"])
    kv2d = pallas_linear(y.reshape(b * s2, kdim), prep["kv_wt"], prep["kv_b"])

    # Lane-dense (B, H, S, D) re-layout (layout plumbing so the attention
    # kernel gets dense D-lane blocks regardless of head_dim alignment).
    q_bhsd = q2d.reshape(b, s1, H, D).transpose(0, 2, 1, 3)
    kv5 = kv2d.reshape(b, s2, 2, H, D)
    k_bhsd = kv5[:, :, 0].transpose(0, 2, 1, 3)
    v_bhsd = kv5[:, :, 1].transpose(0, 2, 1, 3)

    # Flash attention (online softmax); RoPE + scale fused & hoisted in-kernel.
    ctx = pallas_flash_cross_attention(q_bhsd, k_bhsd, v_bhsd, cos_hs, sin_hs)
    ctx = ctx.transpose(0, 2, 1, 3).reshape(b * s1, qdim)

    # out_proj; attn_drop=0 and proj_drop(p=0) are identities in eval.
    out = pallas_linear(ctx, prep["out_wt"], prep["out_b"]).reshape(b, s1, qdim)
    return (out,)


# ----------------------------------------------------------------------------
# Reference (plain JAX, original interleaved RoPE convention, original params)
# ----------------------------------------------------------------------------

def _rotate_half_ref(x):
    xr = x[..., 0::2]
    xi = x[..., 1::2]
    return jnp.stack([-xi, xr], axis=-1).reshape(x.shape)


def _apply_rope_ref(q, cos, sin):
    cos_b = cos[None, :, None, :]
    sin_b = sin[None, :, None, :]
    qf = q.astype(jnp.float32)
    return (qf * cos_b + _rotate_half_ref(qf) * sin_b).astype(q.dtype)


def reference_forward(params, x, y, freqs_cis_img, num_heads):
    b, s1, qdim = x.shape
    _, s2, kdim = y.shape
    head_dim = qdim // num_heads
    scale = head_dim ** (-0.5)

    q = x @ params["q_w"].T + params["q_b"]
    kv = y @ params["kv_w"].T + params["kv_b"]
    q = q.reshape(b, s1, num_heads, head_dim)
    kv = kv.reshape(b, s2, 2, num_heads, head_dim)
    k, v = kv[:, :, 0], kv[:, :, 1]
    if freqs_cis_img is not None:
        cos, sin = freqs_cis_img
        q = _apply_rope_ref(q, cos, sin)
    qh = jnp.transpose(q, (0, 2, 1, 3)).astype(jnp.float32)
    kh = jnp.transpose(k, (0, 2, 1, 3)).astype(jnp.float32)
    vh = jnp.transpose(v, (0, 2, 1, 3)).astype(jnp.float32)
    scores = jnp.einsum("bhqd,bhkd->bhqk", qh, kh) * scale
    p = jax.nn.softmax(scores, axis=-1)
    ctx = jnp.einsum("bhqk,bhkd->bhqd", p, vh)
    ctx = jnp.transpose(ctx, (0, 2, 1, 3)).reshape(b, s1, qdim)
    return ctx @ params["out_w"].T + params["out_b"]


# ----------------------------------------------------------------------------
# Main
# ----------------------------------------------------------------------------

if __name__ == "__main__":
    # Keep the XLA reference and the Pallas kernels on the same f32 matmul
    # path so the comparison isn't dominated by bf16-pass rounding.
    jax.config.update("jax_default_matmul_precision", "highest")

    # Small shapes consistent with the module constraints
    # (head_dim % 8 == 0, head_dim <= 192, qdim % num_heads == 0).
    b, s1, s2 = 2, 16, 8
    qdim, kdim, num_heads = 32, 16, 4
    head_dim = qdim // num_heads

    key = jax.random.PRNGKey(0)
    ks = jax.random.split(key, 8)

    params = {
        # nn.Linear weights are (out_features, in_features)
        "q_w":   0.05 * jax.random.normal(ks[0], (qdim, qdim), jnp.float32),
        "q_b":   0.01 * jax.random.normal(ks[1], (qdim,), jnp.float32),
        "kv_w":  0.05 * jax.random.normal(ks[2], (2 * qdim, kdim), jnp.float32),
        "kv_b":  0.01 * jax.random.normal(ks[3], (2 * qdim,), jnp.float32),
        "out_w": 0.05 * jax.random.normal(ks[4], (qdim, qdim), jnp.float32),
        "out_b": 0.01 * jax.random.normal(ks[5], (qdim,), jnp.float32),
    }

    x = jax.random.normal(ks[6], (b, s1, qdim), jnp.float32)
    y = jax.random.normal(ks[7], (b, s2, kdim), jnp.float32)

    # Deterministic RoPE frequencies: (s1, head_dim) cos/sin, interleaved pairs.
    pos = jnp.arange(s1, dtype=jnp.float32)
    inv_freq = 1.0 / (10000.0 ** (jnp.arange(0, head_dim, 2, dtype=jnp.float32)
                                  / head_dim))
    angles = jnp.outer(pos, inv_freq)                     # (s1, head_dim/2)
    angles = jnp.repeat(angles, 2, axis=-1)               # (s1, head_dim)
    freqs_cis_img = (jnp.cos(angles), jnp.sin(angles))

    # One-time prep (kept out of the forward path).
    prep = prepare_cross_attention_params(params, num_heads=num_heads)
    rope = prepare_rope_tables(freqs_cis_img, head_dim=head_dim, s1=s1)

    out = cross_attention_forward(prep, x, y, rope)[0]
    out = jax.block_until_ready(out)

    ref = reference_forward(params, x, y, freqs_cis_img, num_heads)
    assert out.shape == (b, s1, qdim)
    err = float(jnp.max(jnp.abs(out - ref)))
    assert jnp.allclose(out, ref, atol=2e-3, rtol=2e-3), err

    print("KERNEL_OK")
</pallas_src>

<mosaic_0001>
module attributes {stable_mosaic.version = 11 : i64} {
  func.func @_linear_kernel(%arg0: i32, %arg1: i32, %arg2: i32, %arg3: memref<32x32xf32, #tpu.memory_space<vmem>>, %arg4: memref<32x32xf32, #tpu.memory_space<vmem>>, %arg5: memref<1x32xf32, #tpu.memory_space<vmem>>, %arg6: memref<32x32xf32, #tpu.memory_space<vmem>>, %arg7: memref<32x32xf32, #tpu.memory_space<vmem>>) attributes {dimension_semantics = [#tpu.dimension_semantics<parallel>, #tpu.dimension_semantics<parallel>, #tpu.dimension_semantics<arbitrary>], iteration_bounds = array<i64: 1, 1, 1>, scalar_prefetch = 0 : i64, scratch_operands = 1 : i64, tpu.core_type = #tpu.core_type<tc>, window_params = [{transform_indices = @transform_0, window_bounds = array<i64: 32, 32>}, {transform_indices = @transform_1, window_bounds = array<i64: 32, 32>}, {transform_indices = @transform_2, window_bounds = array<i64: 1, 32>}, {transform_indices = @transform_3, window_bounds = array<i64: 32, 32>}]} {
    %c0_i32 = arith.constant 0 : i32
    %0 = arith.cmpi eq, %arg2, %c0_i32 : i32
    %1 = arith.extui %0 : i1 to i32
    %c0_i32_0 = arith.constant 0 : i32
    %2 = arith.cmpi ne, %1, %c0_i32_0 : i32
    scf.if %2 {
      %cst_10 = arith.constant 0.000000e+00 : f32
      %12 = vector.broadcast %cst_10 : f32 to vector<32x32xf32>
      %c0_11 = arith.constant 0 : index
      %c0_12 = arith.constant 0 : index
      %13 = vector.load %arg7[%c0_11, %c0_12] : memref<32x32xf32, #tpu.memory_space<vmem>>, vector<32x32xf32>
      tpu.vector_store %arg7[%c0_11, %c0_12], %12 {strides = array<i32>} : memref<32x32xf32, #tpu.memory_space<vmem>>, vector<32x32xf32>,
    } else {
    }
    %c0 = arith.constant 0 : index
    %c0_1 = arith.constant 0 : index
    %3 = vector.load %arg7[%c0, %c0_1] : memref<32x32xf32, #tpu.memory_space<vmem>>, vector<32x32xf32>
    %c0_2 = arith.constant 0 : index
    %c0_3 = arith.constant 0 : index
    %4 = vector.load %arg3[%c0_2, %c0_3] : memref<32x32xf32, #tpu.memory_space<vmem>>, vector<32x32xf32>
    %c0_4 = arith.constant 0 : index
    %c0_5 = arith.constant 0 : index
    %5 = vector.load %arg4[%c0_4, %c0_5] : memref<32x32xf32, #tpu.memory_space<vmem>>, vector<32x32xf32>
    %cst = arith.constant dense<0.000000e+00> : vector<32x32xf32>
    %6 = tpu.matmul %4, %5, %cst {dimension_numbers = #tpu.dot_dimension_numbers<[1], [0], [0], [1], [0, 0, 1, 1], [], []>, precision = #tpu.contract_precision<fp32>} : vector<32x32xf32>, vector<32x32xf32>, vector<32x32xf32> -> vector<32x32xf32>
    %7 = arith.addf %3, %6 : vector<32x32xf32>
    %c0_6 = arith.constant 0 : index
    %c0_7 = arith.constant 0 : index
    %8 = vector.load %arg7[%c0_6, %c0_7] : memref<32x32xf32, #tpu.memory_space<vmem>>, vector<32x32xf32>
    tpu.vector_store %arg7[%c0_6, %c0_7], %7 {strides = array<i32>} : memref<32x32xf32, #tpu.memory_space<vmem>>, vector<32x32xf32>,
    %c0_i32_8 = arith.constant 0 : i32
    %9 = arith.cmpi eq, %arg2, %c0_i32_8 : i32
    %10 = arith.extui %9 : i1 to i32
    %c0_i32_9 = arith.constant 0 : i32
    %11 = arith.cmpi ne, %10, %c0_i32_9 : i32
    scf.if %11 {
      %c0_10 = arith.constant 0 : index
      %c0_11 = arith.constant 0 : index
      %12 = vector.load %arg7[%c0_10, %c0_11] : memref<32x32xf32, #tpu.memory_space<vmem>>, vector<32x32xf32>
      %c0_12 = arith.constant 0 : index
      %c0_13 = arith.constant 0 : index
      %13 = vector.load %arg5[%c0_12, %c0_13] : memref<1x32xf32, #tpu.memory_space<vmem>>, vector<1x32xf32>
      %14 = vector.broadcast %13 : vector<1x32xf32> to vector<32x32xf32>
      %15 = arith.addf %12, %14 : vector<32x32xf32>
      %c0_14 = arith.constant 0 : index
      %c0_15 = arith.constant 0 : index
      %16 = vector.load %arg6[%c0_14, %c0_15] : memref<32x32xf32, #tpu.memory_space<vmem>>, vector<32x32xf32>
      tpu.vector_store %arg6[%c0_14, %c0_15], %15 {strides = array<i32>} : memref<32x32xf32, #tpu.memory_space<vmem>>, vector<32x32xf32>,
    } else {
    }
    return
  }
  func.func @transform_0(%arg0: i32, %arg1: i32, %arg2: i32) -> (i32, i32) {
    %c0_i32 = arith.constant 0 : i32
    return %arg0, %arg2 : i32, i32
  }
  func.func @transform_1(%arg0: i32, %arg1: i32, %arg2: i32) -> (i32, i32) {
    %c0_i32 = arith.constant 0 : i32
    return %arg2, %arg1 : i32, i32
  }
  func.func @transform_2(%arg0: i32, %arg1: i32, %arg2: i32) -> (i32, i32) {
    %c0_i32 = arith.constant 0 : i32
    %c0_i32_0 = arith.constant 0 : i32
    return %c0_i32, %arg1 : i32, i32
  }
  func.func @transform_3(%arg0: i32, %arg1: i32, %arg2: i32) -> (i32, i32) {
    %c0_i32 = arith.constant 0 : i32
    return %arg0, %arg1 : i32, i32
  }
}

</mosaic_0001>

<llo_original>
// kernel: tpu_custom_call.1
$region0: #{tpu_custom_call.1}
  #allocation0 [shape = 'u32[]', space=smem, size = 0x4, offset = 0x4, fixed_abs, tag = 'smem constant byte address 0x4 - core index']
  #allocation1 [shape = 'u32[72,128]{1,0:T(1,128)}', space=vmem, size = 0x9000, scoped, tag = 'internal scratch']
  #allocation2 [shape = 'f32[32,32]{1,0:T(8,128)}', space=vmem, size = 0x4000, scoped, tag = 'scratch operand']
  %s0 = inlined_call_operand.hbm [shape: f32[32,32], index: 0, kind: input, shape index: {}]
  %s1 = inlined_call_operand.hbm [shape: f32[32,32], index: 1, kind: input, shape index: {}]
  %s2 = inlined_call_operand.vmem [shape: f32[1,32], index: 2, kind: input, shape index: {}]
  %s3 = inlined_call_operand.hbm [shape: f32[32,32], index: 3, kind: output, shape index: {}]
  %s4 = sld [smem:[#allocation0]]
  $region38: #{tpu_custom_call.1} parent=0
    _
  %s6 = ssub.s32 1, %s4
  %s7 = scalar_select 0, %s6, %s4
  $region1: #{tpu_custom_call.1} parent=0
    #allocation3 [shape = 'u8[16384]{0}', space=vmem, size = 0x4000, scoped, tag = 'input window, operand 0, single buffered']
    #allocation4 [shape = 's32[1]{0}', space=sflag, size = 0x4, scoped, tag = 'scoped memory for tpu_custom_call.1']
    #allocation5 [shape = 's32[1]{0}', space=sflag, size = 0x4, scoped, tag = 'scoped memory for tpu_custom_call.1']
    #allocation6 [shape = 'u8[16384]{0}', space=vmem, size = 0x4000, scoped, tag = 'input window, operand 1, single buffered']
    #allocation7 [shape = 's32[1]{0}', space=sflag, size = 0x4, scoped, tag = 'scoped memory for tpu_custom_call.1']
    #allocation8 [shape = 'u8[16384]{0}', space=vmem, size = 0x4000, scoped, tag = 'output window, operand 0, single buffered']
    %8 = vsyncpa [#allocation4], 0
    %9 = vsyncpa [#allocation7], 0
    %10 = vsyncpa [#allocation5], 0
    // Predicated region
    $region2: #{tpu_custom_call.1} parent=1 // pred_check
      _
    $region3: #{tpu_custom_call.1} parent=1 // pred_check_branch
      %12 = sbr.rel (0) target = $region5
    $region4: #{tpu_custom_call.1} parent=1 // pred_region
      %14 = vsyncadd [#allocation4], 0
      %s15 = sshll.u32 %s0, 4
      %s16 = int_to_ptr.hbm [resolvable:$true] %s15
      %s17 = sshll.u32 [#allocation3], 4
      %s18 = int_to_ptr.vmem [resolvable:$true] %s17
      %23 = dma.hbm_to_vmem [thread:$0]  %s16, 512, %s18, [#allocation4], 128, 128, 8
    $region5: #{tpu_custom_call.1} parent=1 // pred_fallthru
      _
    // Predicated region
    $region6: #{tpu_custom_call.1} parent=1 // pred_check
      _
    $region7: #{tpu_custom_call.1} parent=1 // pred_check_branch
      %25 = sbr.rel (0) target = $region9
    $region8: #{tpu_custom_call.1} parent=1 // pred_region
      %27 = vsyncadd [#allocation7], 0
      %s28 = sshll.u32 %s1, 4
      %s29 = int_to_ptr.hbm [resolvable:$true] %s28
      %s30 = sshll.u32 [#allocation6], 4
      %s31 = int_to_ptr.vmem [resolvable:$true] %s30
      %36 = dma.hbm_to_vmem [thread:$0]  %s29, 512, %s31, [#allocation7], 128, 128, 8
    $region9: #{tpu_custom_call.1} parent=1 // pred_fallthru
      _
    // Predicated region
    $region10: #{tpu_custom_call.1} parent=1 // pred_check
      _
    $region11: #{tpu_custom_call.1} parent=1 // pred_check_branch
      %38 = sbr.rel (0) target = $region13
    $region12: #{tpu_custom_call.1} parent=1 // pred_region
      _
    $region13: #{tpu_custom_call.1} parent=1 // pred_fallthru
      _
    // Predicated region
    $region14: #{tpu_custom_call.1} parent=1 // pred_check
      _
    $region15: #{tpu_custom_call.1} parent=1 // pred_check_branch
      %40 = sbr.rel (0) target = $region17
    $region16: #{tpu_custom_call.1} parent=1 // pred_region
      %42 = dma.done [#allocation4], 512
    $region17: #{tpu_custom_call.1} parent=1 // pred_fallthru
      _
    // Predicated region
    $region18: #{tpu_custom_call.1} parent=1 // pred_check
      _
    $region19: #{tpu_custom_call.1} parent=1 // pred_check_branch
      %44 = sbr.rel (0) target = $region21
    $region20: #{tpu_custom_call.1} parent=1 // pred_region
      %46 = dma.done [#allocation7], 512
    $region21: #{tpu_custom_call.1} parent=1 // pred_fallthru
      _
    %p47 = scmp.eq.s32.totalorder 0, 0
    // Predicated region
    $region22: #{tpu_custom_call.1} parent=1 // pred_check
      %p48 = pneg %p47
    $region23: #{tpu_custom_call.1} parent=1 // pred_check_branch
      %50 = sbr.rel (%p48) target = $region25
    $region24: #{tpu_custom_call.1} parent=1 // pred_region
      %vm51 = vcmask 261120
      %52 = vst.msk [vmem:[#allocation2] sm:$0xff] %vm51, 0.0
      %53 = vst.msk [vmem:[#allocation2 + $0x8] sm:$0xff] %vm51, 0.0
      %54 = vst.msk [vmem:[#allocation2 + $0x10] sm:$0xff] %vm51, 0.0
      %55 = vst.msk [vmem:[#allocation2 + $0x18] sm:$0xff] %vm51, 0.0
    $region25: #{tpu_custom_call.1} parent=1 // pred_fallthru
      _
    %v56 = vld [vmem:[#allocation2] sm:$0xff]
    %v57 = vld [vmem:[#allocation2 + $0x8] sm:$0xff]
    %v58 = vld [vmem:[#allocation2 + $0x10] sm:$0xff]
    %v59 = vld [vmem:[#allocation2 + $0x18] sm:$0xff]
    %v60 = vld [vmem:[#allocation3] sm:$0xff]
    %v61 = vld [vmem:[#allocation3 + $0x8] sm:$0xff]
    %v62 = vld [vmem:[#allocation3 + $0x10] sm:$0xff]
    %v63 = vld [vmem:[#allocation3 + $0x18] sm:$0xff]
    %v64 = vld [vmem:[#allocation6] sm:$0xff]
    %v65 = vld [vmem:[#allocation6 + $0x8] sm:$0xff]
    %v66 = vld [vmem:[#allocation6 + $0x10] sm:$0xff]
    %v67 = vld [vmem:[#allocation6 + $0x18] sm:$0xff]
    %vm68 = vcmask 261120
    %v70 = vsel %vm68, %v60, 0
    %v73 = vsel %vm68, %v61, 0
    %v76 = vsel %vm68, %v62, 0
    %v79 = vsel %vm68, %v63, 0
    %81 = vmatpush.msra.mxu0 0.0
    %82 = vmatpush.msra.mxu0 0.0
    %83 = vmatpush.msra.mxu0 0.0
    %84 = vmatpush.msra.mxu0 0.0
    %85 = vmatpush.msra.mxu0 0.0
    %86 = vmatpush.msra.mxu0 0.0
    %87 = vmatpush.msra.mxu0 0.0
    %88 = vmatpush.msra.mxu0 0.0
    %89 = vmatpush.msra.mxu0 0.0
    %90 = vmatpush.msra.mxu0 0.0
    %91 = vmatpush.msra.mxu0 0.0
    %92 = vmatpush.msra.mxu0 0.0
    %v93 = vand.u32 %v67, 4294901760
    %94 = vmatpush.msra.mxu0 %v93
    %v95 = vand.u32 %v66, 4294901760
    %96 = vmatpush.msra.mxu0 %v95
    %v97 = vand.u32 %v65, 4294901760
    %98 = vmatpush.msra.mxu0 %v97
    %v99 = vand.u32 %v64, 4294901760
    %100 = vmatpush.msra.mxu0 %v99
    %v101 = vand.u32 %v70, 4294901760
    %v102 = vsub.f32 %v70, %v101
    %v103 = vand.u32 %v102, 4294901760
    %v104 = vsub.f32 %v102, %v103
    %v105 = vand.u32 %v104, 4294901760
    %106 = vmatmul.f32.gmra.mxu0 %v105
    %v107 = vpop.f32.mrf.mxu0
    %v108 = vadd.f32 0.0, %v107
    %v109 = vand.u32 %v73, 4294901760
    %v110 = vsub.f32 %v73, %v109
    %v111 = vand.u32 %v110, 4294901760
    %v112 = vsub.f32 %v110, %v111
    %v113 = vand.u32 %v112, 4294901760
    %114 = vmatmul.f32.gmra.mxu0 %v113
    %v115 = vpop.f32.mrf.mxu0
    %v116 = vadd.f32 0.0, %v115
    %v117 = vand.u32 %v76, 4294901760
    %v118 = vsub.f32 %v76, %v117
    %v119 = vand.u32 %v118, 4294901760
    %v120 = vsub.f32 %v118, %v119
    %v121 = vand.u32 %v120, 4294901760
    %122 = vmatmul.f32.gmra.mxu0 %v121
    %v123 = vpop.f32.mrf.mxu0
    %v124 = vadd.f32 0.0, %v123
    %v125 = vand.u32 %v79, 4294901760
    %v126 = vsub.f32 %v79, %v125
    %v127 = vand.u32 %v126, 4294901760
    %v128 = vsub.f32 %v126, %v127
    %v129 = vand.u32 %v128, 4294901760
    %130 = vmatmul.f32.gmra.mxu0 %v129
    %v131 = vpop.f32.mrf.mxu0
    %v132 = vadd.f32 0.0, %v131
    %133 = vdwg.mxu0
    %134 = vmatpush.msra.mxu0 0.0
    %135 = vmatpush.msra.mxu0 0.0
    %136 = vmatpush.msra.mxu0 0.0
    %137 = vmatpush.msra.mxu0 0.0
    %138 = vmatpush.msra.mxu0 0.0
    %139 = vmatpush.msra.mxu0 0.0
    %140 = vmatpush.msra.mxu0 0.0
    %141 = vmatpush.msra.mxu0 0.0
    %142 = vmatpush.msra.mxu0 0.0
    %143 = vmatpush.msra.mxu0 0.0
    %144 = vmatpush.msra.mxu0 0.0
    %145 = vmatpush.msra.mxu0 0.0
    %v146 = vand.u32 %v67, 4294901760
    %v147 = vsub.f32 %v67, %v146
    %v148 = vand.u32 %v147, 4294901760
    %v149 = vsub.f32 %v147, %v148
    %v150 = vand.u32 %v149, 4294901760
    %151 = vmatpush.msra.mxu0 %v150
    %v152 = vand.u32 %v66, 4294901760
    %v153 = vsub.f32 %v66, %v152
    %v154 = vand.u32 %v153, 4294901760
    %v155 = vsub.f32 %v153, %v154
    %v156 = vand.u32 %v155, 4294901760
    %157 = vmatpush.msra.mxu0 %v156
    %v158 = vand.u32 %v65, 4294901760
    %v159 = vsub.f32 %v65, %v158
    %v160 = vand.u32 %v159, 4294901760
    %v161 = vsub.f32 %v159, %v160
    %v162 = vand.u32 %v161, 4294901760
    %163 = vmatpush.msra.mxu0 %v162
    %v164 = vand.u32 %v64, 4294901760
    %v165 = vsub.f32 %v64, %v164
    %v166 = vand.u32 %v165, 4294901760
    %v167 = vsub.f32 %v165, %v166
    %v168 = vand.u32 %v167, 4294901760
    %169 = vmatpush.msra.mxu0 %v168
    %v170 = vand.u32 %v70, 4294901760
    %171 = vmatmul.f32.gmra.mxu0 %v170
    %v172 = vpop.f32.mrf.mxu0
    %v173 = vadd.f32 %v108, %v172
    %v174 = vand.u32 %v73, 4294901760
    %175 = vmatmul.f32.gmra.mxu0 %v174
    %v176 = vpop.f32.mrf.mxu0
    %v177 = vadd.f32 %v116, %v176
    %v178 = vand.u32 %v76, 4294901760
    %179 = vmatmul.f32.gmra.mxu0 %v178
    %v180 = vpop.f32.mrf.mxu0
    %v181 = vadd.f32 %v124, %v180
    %v182 = vand.u32 %v79, 4294901760
    %183 = vmatmul.f32.gmra.mxu0 %v182
    %v184 = vpop.f32.mrf.mxu0
    %v185 = vadd.f32 %v132, %v184
    %186 = vdwg.mxu0
    %187 = vmatpush.msra.mxu0 0.0
    %188 = vmatpush.msra.mxu0 0.0
    %189 = vmatpush.msra.mxu0 0.0
    %190 = vmatpush.msra.mxu0 0.0
    %191 = vmatpush.msra.mxu0 0.0
    %192 = vmatpush.msra.mxu0 0.0
    %193 = vmatpush.msra.mxu0 0.0
    %194 = vmatpush.msra.mxu0 0.0
    %195 = vmatpush.msra.mxu0 0.0
    %196 = vmatpush.msra.mxu0 0.0
    %197 = vmatpush.msra.mxu0 0.0
    %198 = vmatpush.msra.mxu0 0.0
    %v199 = vand.u32 %v67, 4294901760
    %v200 = vsub.f32 %v67, %v199
    %201 = vmatpush.msra.mxu0 %v200
    %v202 = vand.u32 %v66, 4294901760
    %v203 = vsub.f32 %v66, %v202
    %204 = vmatpush.msra.mxu0 %v203
    %v205 = vand.u32 %v65, 4294901760
    %v206 = vsub.f32 %v65, %v205
    %207 = vmatpush.msra.mxu0 %v206
    %v208 = vand.u32 %v64, 4294901760
    %v209 = vsub.f32 %v64, %v208
    %210 = vmatpush.msra.mxu0 %v209
    %v211 = vand.u32 %v70, 4294901760
    %v212 = vsub.f32 %v70, %v211
    %213 = vmatmul.f32.gmra.mxu0 %v212
    %v214 = vpop.f32.mrf.mxu0
    %v215 = vadd.f32 %v173, %v214
    %v216 = vand.u32 %v73, 4294901760
    %v217 = vsub.f32 %v73, %v216
    %218 = vmatmul.f32.gmra.mxu0 %v217
    %v219 = vpop.f32.mrf.mxu0
    %v220 = vadd.f32 %v177, %v219
    %v221 = vand.u32 %v76, 4294901760
    %v222 = vsub.f32 %v76, %v221
    %223 = vmatmul.f32.gmra.mxu0 %v222
    %v224 = vpop.f32.mrf.mxu0
    %v225 = vadd.f32 %v181, %v224
    %v226 = vand.u32 %v79, 4294901760
    %v227 = vsub.f32 %v79, %v226
    %228 = vmatmul.f32.gmra.mxu0 %v227
    %v229 = vpop.f32.mrf.mxu0
    %v230 = vadd.f32 %v185, %v229
    %231 = vdwg.mxu0
    %232 = vmatpush.msra.mxu0 0.0
    %233 = vmatpush.msra.mxu0 0.0
    %234 = vmatpush.msra.mxu0 0.0
    %235 = vmatpush.msra.mxu0 0.0
    %236 = vmatpush.msra.mxu0 0.0
    %237 = vmatpush.msra.mxu0 0.0
    %238 = vmatpush.msra.mxu0 0.0
    %239 = vmatpush.msra.mxu0 0.0
    %240 = vmatpush.msra.mxu0 0.0
    %241 = vmatpush.msra.mxu0 0.0
    %242 = vmatpush.msra.mxu0 0.0
    %243 = vmatpush.msra.mxu0 0.0
    %v244 = vand.u32 %v67, 4294901760
    %245 = vmatpush.msra.mxu0 %v244
    %v246 = vand.u32 %v66, 4294901760
    %247 = vmatpush.msra.mxu0 %v246
    %v248 = vand.u32 %v65, 4294901760
    %249 = vmatpush.msra.mxu0 %v248
    %v250 = vand.u32 %v64, 4294901760
    %251 = vmatpush.msra.mxu0 %v250
    %v252 = vand.u32 %v70, 4294901760
    %v253 = vsub.f32 %v70, %v252
    %v254 = vand.u32 %v253, 4294901760
    %255 = vmatmul.f32.gmra.mxu0 %v254
    %v256 = vpop.f32.mrf.mxu0
    %v257 = vadd.f32 %v215, %v256
    %v258 = vand.u32 %v73, 4294901760
    %v259 = vsub.f32 %v73, %v258
    %v260 = vand.u32 %v259, 4294901760
    %261 = vmatmul.f32.gmra.mxu0 %v260
    %v262 = vpop.f32.mrf.mxu0
    %v263 = vadd.f32 %v220, %v262
    %v264 = vand.u32 %v76, 4294901760
    %v265 = vsub.f32 %v76, %v264
    %v266 = vand.u32 %v265, 4294901760
    %267 = vmatmul.f32.gmra.mxu0 %v266
    %v268 = vpop.f32.mrf.mxu0
    %v269 = vadd.f32 %v225, %v268
    %v270 = vand.u32 %v79, 4294901760
    %v271 = vsub.f32 %v79, %v270
    %v272 = vand.u32 %v271, 4294901760
    %273 = vmatmul.f32.gmra.mxu0 %v272
    %v274 = vpop.f32.mrf.mxu0
    %v275 = vadd.f32 %v230, %v274
    %276 = vdwg.mxu0
    %277 = vmatpush.msra.mxu0 0.0
    %278 = vmatpush.msra.mxu0 0.0
    %279 = vmatpush.msra.mxu0 0.0
    %280 = vmatpush.msra.mxu0 0.0
    %281 = vmatpush.msra.mxu0 0.0
    %282 = vmatpush.msra.mxu0 0.0
    %283 = vmatpush.msra.mxu0 0.0
    %284 = vmatpush.msra.mxu0 0.0
    %285 = vmatpush.msra.mxu0 0.0
    %286 = vmatpush.msra.mxu0 0.0
    %287 = vmatpush.msra.mxu0 0.0
    %288 = vmatpush.msra.mxu0 0.0
    %v289 = vand.u32 %v67, 4294901760
    %v290 = vsub.f32 %v67, %v289
    %v291 = vand.u32 %v290, 4294901760
    %292 = vmatpush.msra.mxu0 %v291
    %v293 = vand.u32 %v66, 4294901760
    %v294 = vsub.f32 %v66, %v293
    %v295 = vand.u32 %v294, 4294901760
    %296 = vmatpush.msra.mxu0 %v295
    %v297 = vand.u32 %v65, 4294901760
    %v298 = vsub.f32 %v65, %v297
    %v299 = vand.u32 %v298, 4294901760
    %300 = vmatpush.msra.mxu0 %v299
    %v301 = vand.u32 %v64, 4294901760
    %v302 = vsub.f32 %v64, %v301
    %v303 = vand.u32 %v302, 4294901760
    %304 = vmatpush.msra.mxu0 %v303
    %v305 = vand.u32 %v70, 4294901760
    %306 = vmatmul.f32.gmra.mxu0 %v305
    %v307 = vpop.f32.mrf.mxu0
    %v308 = vadd.f32 %v257, %v307
    %v309 = vand.u32 %v73, 4294901760
    %310 = vmatmul.f32.gmra.mxu0 %v309
    %v311 = vpop.f32.mrf.mxu0
    %v312 = vadd.f32 %v263, %v311
    %v313 = vand.u32 %v76, 4294901760
    %314 = vmatmul.f32.gmra.mxu0 %v313
    %v315 = vpop.f32.mrf.mxu0
    %v316 = vadd.f32 %v269, %v315
    %v317 = vand.u32 %v79, 4294901760
    %318 = vmatmul.f32.gmra.mxu0 %v317
    %v319 = vpop.f32.mrf.mxu0
    %v320 = vadd.f32 %v275, %v319
    %321 = vdwg.mxu0
    %322 = vmatpush.msra.mxu0 0.0
    %323 = vmatpush.msra.mxu0 0.0
    %324 = vmatpush.msra.mxu0 0.0
    %325 = vmatpush.msra.mxu0 0.0
    %326 = vmatpush.msra.mxu0 0.0
    %327 = vmatpush.msra.mxu0 0.0
    %328 = vmatpush.msra.mxu0 0.0
    %329 = vmatpush.msra.mxu0 0.0
    %330 = vmatpush.msra.mxu0 0.0
    %331 = vmatpush.msra.mxu0 0.0
    %332 = vmatpush.msra.mxu0 0.0
    %333 = vmatpush.msra.mxu0 0.0
    %v334 = vand.u32 %v67, 4294901760
    %335 = vmatpush.msra.mxu0 %v334
    %v336 = vand.u32 %v66, 4294901760
    %337 = vmatpush.msra.mxu0 %v336
    %v338 = vand.u32 %v65, 4294901760
    %339 = vmatpush.msra.mxu0 %v338
    %v340 = vand.u32 %v64, 4294901760
    %341 = vmatpush.msra.mxu0 %v340
    %v342 = vand.u32 %v70, 4294901760
    %343 = vmatmul.f32.gmra.mxu0 %v342
    %v344 = vpop.f32.mrf.mxu0
    %v345 = vadd.f32 %v308, %v344
    %v346 = vand.u32 %v73, 4294901760
    %347 = vmatmul.f32.gmra.mxu0 %v346
    %v348 = vpop.f32.mrf.mxu0
    %v349 = vadd.f32 %v312, %v348
    %v350 = vand.u32 %v76, 4294901760
    %351 = vmatmul.f32.gmra.mxu0 %v350
    %v352 = vpop.f32.mrf.mxu0
    %v353 = vadd.f32 %v316, %v352
    %v354 = vand.u32 %v79, 4294901760
    %355 = vmatmul.f32.gmra.mxu0 %v354
    %v356 = vpop.f32.mrf.mxu0
    %v357 = vadd.f32 %v320, %v356
    %358 = vdwg.mxu0
    %v359 = vadd.f32 %v56, %v345
    %v360 = vadd.f32 %v57, %v349
    %v361 = vadd.f32 %v58, %v353
    %v362 = vadd.f32 %v59, %v357
    %363 = vst.msk [vmem:[#allocation2] sm:$0xff] %vm68, %v359
    %364 = vst.msk [vmem:[#allocation2 + $0x8] sm:$0xff] %vm68, %v360
    %365 = vst.msk [vmem:[#allocation2 + $0x10] sm:$0xff] %vm68, %v361
    %366 = vst.msk [vmem:[#allocation2 + $0x18] sm:$0xff] %vm68, %v362
    // Predicated region
    $region26: #{tpu_custom_call.1} parent=1 // pred_check
      %p367 = pneg %p47
    $region27: #{tpu_custom_call.1} parent=1 // pred_check_branch
      %369 = sbr.rel (%p367) target = $region29
    $region28: #{tpu_custom_call.1} parent=1 // pred_region
      %v370 = vld [vmem:[#allocation2] sm:$0xff]
      %v371 = vld [vmem:[#allocation2 + $0x8] sm:$0xff]
      %v372 = vld [vmem:[#allocation2 + $0x10] sm:$0xff]
      %v373 = vld [vmem:[#allocation2 + $0x18] sm:$0xff]
      %v374 = vld [vmem:[%s2] sm:$0x1]
      %v376 = vperm.slane %v374, 0
      %v378 = vadd.f32 %v370, %v376
      %v379 = vadd.f32 %v371, %v376
      %v380 = vadd.f32 %v372, %v376
      %v381 = vadd.f32 %v373, %v376
      %382 = vst.msk [vmem:[#allocation8] sm:$0xff] %vm68, %v378
      %383 = vst.msk [vmem:[#allocation8 + $0x8] sm:$0xff] %vm68, %v379
      %384 = vst.msk [vmem:[#allocation8 + $0x10] sm:$0xff] %vm68, %v380
      %385 = vst.msk [vmem:[#allocation8 + $0x18] sm:$0xff] %vm68, %v381
    $region29: #{tpu_custom_call.1} parent=1 // pred_fallthru
      _
    // Predicated region
    $region30: #{tpu_custom_call.1} parent=1 // pred_check
      _
    $region31: #{tpu_custom_call.1} parent=1 // pred_check_branch
      %387 = sbr.rel (0) target = $region33
    $region32: #{tpu_custom_call.1} parent=1 // pred_region
      %389 = vsyncadd [#allocation5], 0
      %s390 = sshll.u32 [#allocation8], 4
      %s391 = int_to_ptr.vmem [resolvable:$true] %s390
      %s392 = sshll.u32 %s3, 4
      %s393 = int_to_ptr.hbm [resolvable:$true] %s392
      %398 = dma.vmem_to_hbm [thread:$0]  %s391, 512, %s393, [#allocation5], 128, 128, 8
    $region33: #{tpu_custom_call.1} parent=1 // pred_fallthru
      _
    // Predicated region
    $region34: #{tpu_custom_call.1} parent=1 // pred_check
      _
    $region35: #{tpu_custom_call.1} parent=1 // pred_check_branch
      %400 = sbr.rel (0) target = $region37
    $region36: #{tpu_custom_call.1} parent=1 // pred_region
      %402 = dma.done [#allocation5], 512
    $region37: #{tpu_custom_call.1} parent=1 // pred_fallthru
      _
    %403 = vsyncpa [#allocation4], 1
    %404 = vsyncpa [#allocation7], 1
    %405 = vsyncpa [#allocation5], 1

</llo_original>
